<compile_context>
chip_gen: v6e
topology: v6e:2x2x1
jax: 0.10.0
libtpu: 0.0.40
codegen_flags: <defaults>
</compile_context>

<pallas_src>
import math
import random

import numpy as np
import jax
import jax.numpy as jnp
from jax import lax
from jax.experimental import pallas as pl
from jax.experimental.pallas import tpu as pltpu


def _affine_warp_kernel(mat_ref, x_ref, out_ref):
    # mat_ref: SMEM (6,)        top-2 rows of the inverse (dst -> src) affine matrix
    # x_ref:   VMEM (1, G*H, W) G native (H, W) planes stacked along sublanes
    # out_ref: VMEM (1, G, P)   warped planes, pixel axis (P = H*W) lane-major
    W = x_ref.shape[2]
    G = out_ref.shape[1]
    P = out_ref.shape[2]
    H = x_ref.shape[1] // G

    a00 = mat_ref[0]
    a01 = mat_ref[1]
    a02 = mat_ref[2]
    a10 = mat_ref[3]
    a11 = mat_ref[4]
    a12 = mat_ref[5]

    # Destination pixel coordinates, lane-major (1, P); p = oy*W + ox.
    p_idx = lax.broadcasted_iota(jnp.int32, (1, P), 1)
    if (W & (W - 1)) == 0:
        # power-of-two width: shift/mask (2 VALU ops) instead of integer divide
        shift = int(math.log2(W))
        oy_i = p_idx >> shift
        ox_i = p_idx & (W - 1)
    else:
        oy_i = p_idx // W
        ox_i = p_idx - oy_i * W
    oy = oy_i.astype(jnp.float32)
    ox = ox_i.astype(jnp.float32)
    src_x = a00 * ox + a01 * oy + a02          # (1, P)
    src_y = a10 * ox + a11 * oy + a12          # (1, P)

    # Bilinear hat weights; out-of-bounds neighbors get weight 0 (zeros padding).
    #   G^T[j, p] = max(0, 1 - |j - src_x(p)|)      (W, P)   -> MXU RHS
    #   F^T[i, p] = max(0, 1 - |i - src_y(p)|)      (H, P)   -> VPU
    j_c = lax.broadcasted_iota(jnp.int32, (W, P), 0).astype(jnp.float32)
    g_t = jnp.maximum(0.0, 1.0 - jnp.abs(j_c - src_x))
    i_r = lax.broadcasted_iota(jnp.int32, (H, P), 0).astype(jnp.float32)
    f_t = jnp.maximum(0.0, 1.0 - jnp.abs(i_r - src_y))

    # out[g, p] = sum_i ( sum_j x[g, i, j] * G^T[j, p] ) * F^T[i, p]
    x = x_ref[0].astype(jnp.float32)                          # (G*H, W)  native layout
    t = jnp.dot(x, g_t, preferred_element_type=jnp.float32)   # (G*H, P)  one MXU matmul
    t = t.reshape(G, H, P) * f_t[None, :, :]                  # VPU elementwise
    out_ref[0] = jnp.sum(t, axis=1)                           # (G, P)    sublane reduce


def _kornia_affine_matrix(degree, shear, height, width):
    """Reproduce kornia.geometry.transform.get_affine_matrix2d for
    translations=0, scale=(1,1), angle=degree, sx=sy=shear (3x3, float64)."""
    a = math.radians(degree)
    ca, sa = math.cos(a), math.sin(a)
    cx, cy = width / 2.0, height / 2.0

    # get_rotation_matrix2d(center, -angle, scale=1) == rotation about center
    rot = np.array([[ca, -sa, 0.0],
                    [sa,  ca, 0.0],
                    [0.0, 0.0, 1.0]], dtype=np.float64)
    t_c = np.array([[1.0, 0.0, cx], [0.0, 1.0, cy], [0.0, 0.0, 1.0]], dtype=np.float64)
    t_nc = np.array([[1.0, 0.0, -cx], [0.0, 1.0, -cy], [0.0, 0.0, 1.0]], dtype=np.float64)
    transform_h = t_c @ rot @ t_nc  # translations are zero in the module

    # get_shear_matrix2d(center, sx, sy)  (shear values treated as radians)
    tx = math.tan(shear)
    ty = math.tan(shear)
    shear_m = np.array(
        [[1.0, -tx, tx * cy],
         [-ty, 1.0 + tx * ty, ty * cx + tx * ty * cy],
         [0.0, 0.0, 1.0]], dtype=np.float64)

    return transform_h @ shear_m


def random_affine_diff(image_and_cover, translate=(0, 0), angle=(0.0, 0.0),
                       shear=(0.0, 0.0)):
    """Forward pass of RandomAffine_Diff (cover image is ignored, as in the
    PyTorch module; `translate` is unused there as well)."""
    image, _cover = image_and_cover
    # NOTE: affine parameters are drawn with Python's `random` at call time,
    # matching the PyTorch module (do not jit-wrap this function, or they freeze).
    degree = random.uniform(*angle)
    shear_v = random.uniform(*shear) / 100.0

    b, c, height, width = image.shape
    a_mat = _kornia_affine_matrix(degree, shear_v, height, width)
    a_inv = np.linalg.inv(a_mat)
    mat6 = jnp.asarray(a_inv[:2, :].reshape(-1), dtype=jnp.float32)  # (6,)

    bc = b * c
    p = height * width

    # Single grid step: v5e/v6e are single-TensorCore (a 2-step "parallel" grid
    # is just a serial loop + a duplicated F/G build), and at 16x16 the per-step
    # overhead also beats any v7x cross-core win.  num_groups > 1 only for
    # multi-TC parts at large H*W.
    num_groups = 1
    g = bc // num_groups

    # Native (bc, H, W) layout — no wrapper-side transpose; planes stacked along
    # sublanes so the kernel runs one fat (G*H, W) @ (W, P) MXU matmul.
    # Keep the input dtype; the f32 cast happens in-kernel (free under the MXU).
    x = image.reshape(num_groups, g * height, width)

    out = pl.pallas_call(
        _affine_warp_kernel,
        out_shape=jax.ShapeDtypeStruct((num_groups, g, p), jnp.float32),
        grid=(num_groups,),
        in_specs=[
            pl.BlockSpec(memory_space=pltpu.MemorySpace.SMEM),               # mat6
            pl.BlockSpec((1, g * height, width), lambda n: (n, 0, 0)),       # planes
        ],
        out_specs=pl.BlockSpec((1, g, p), lambda n: (n, 0, 0)),
        compiler_params=pltpu.CompilerParams(dimension_semantics=("parallel",)),
    )(mat6, x)

    return out.reshape(b, c, height, width).astype(image.dtype)


if __name__ == "__main__":
    # Deterministic "random" affine parameters (module draws them with Python's
    # random at forward time).
    random.seed(0)

    key = jax.random.PRNGKey(0)
    k1, k2 = jax.random.split(key)
    image = jax.random.uniform(k1, (2, 4, 16, 16), dtype=jnp.float32)
    cover_image = jax.random.uniform(k2, (2, 4, 16, 16), dtype=jnp.float32)

    out = random_affine_diff((image, cover_image),
                             translate=(0, 0),
                             angle=(-15.0, 15.0),
                             shear=(-10.0, 10.0))
    out = jax.block_until_ready(out)
    assert out.shape == image.shape and out.dtype == image.dtype
    print("KERNEL_OK")
</pallas_src>

<mosaic_0001>
module attributes {stable_mosaic.version = 11 : i64} {
  func.func @_affine_warp_kernel(%arg0: i32, %arg1: memref<6xf32, #tpu.memory_space<smem>>, %arg2: memref<1x128x16xf32, #tpu.memory_space<vmem>>, %arg3: memref<1x8x256xf32, #tpu.memory_space<vmem>>) attributes {dimension_semantics = [#tpu.dimension_semantics<parallel>], iteration_bounds = array<i64: 1>, scalar_prefetch = 0 : i64, scratch_operands = 0 : i64, tpu.core_type = #tpu.core_type<tc>, window_params = [{transform_indices = @transform_0, window_bounds = array<i64: 6>}, {transform_indices = @transform_1, window_bounds = array<i64: 1, 128, 16>}, {transform_indices = @transform_2, window_bounds = array<i64: 1, 8, 256>}]} {
    %c0 = arith.constant 0 : index
    %0 = memref.load %arg1[%c0] : memref<6xf32, #tpu.memory_space<smem>>
    %c1 = arith.constant 1 : index
    %1 = memref.load %arg1[%c1] : memref<6xf32, #tpu.memory_space<smem>>
    %c2 = arith.constant 2 : index
    %2 = memref.load %arg1[%c2] : memref<6xf32, #tpu.memory_space<smem>>
    %c3 = arith.constant 3 : index
    %3 = memref.load %arg1[%c3] : memref<6xf32, #tpu.memory_space<smem>>
    %c4 = arith.constant 4 : index
    %4 = memref.load %arg1[%c4] : memref<6xf32, #tpu.memory_space<smem>>
    %c5 = arith.constant 5 : index
    %5 = memref.load %arg1[%c5] : memref<6xf32, #tpu.memory_space<smem>>
    %6 = tpu.iota {dimensions = array<i32: 1>} : vector<1x256xi32>
    %c4_i32 = arith.constant 4 : i32
    %7 = vector.broadcast %c4_i32 : i32 to vector<1x256xi32>
    %8 = arith.shrsi %6, %7 : vector<1x256xi32>
    %c15_i32 = arith.constant 15 : i32
    %9 = vector.broadcast %c15_i32 : i32 to vector<1x256xi32>
    %10 = arith.andi %6, %9 : vector<1x256xi32>
    %11 = arith.sitofp %8 : vector<1x256xi32> to vector<1x256xf32>
    %12 = arith.sitofp %10 : vector<1x256xi32> to vector<1x256xf32>
    %13 = vector.broadcast %0 : f32 to vector<1x256xf32>
    %14 = arith.mulf %13, %12 : vector<1x256xf32>
    %15 = vector.broadcast %1 : f32 to vector<1x256xf32>
    %16 = arith.mulf %15, %11 : vector<1x256xf32>
    %17 = arith.addf %14, %16 : vector<1x256xf32>
    %18 = vector.broadcast %2 : f32 to vector<1x256xf32>
    %19 = arith.addf %17, %18 : vector<1x256xf32>
    %20 = vector.broadcast %3 : f32 to vector<1x256xf32>
    %21 = arith.mulf %20, %12 : vector<1x256xf32>
    %22 = vector.broadcast %4 : f32 to vector<1x256xf32>
    %23 = arith.mulf %22, %11 : vector<1x256xf32>
    %24 = arith.addf %21, %23 : vector<1x256xf32>
    %25 = vector.broadcast %5 : f32 to vector<1x256xf32>
    %26 = arith.addf %24, %25 : vector<1x256xf32>
    %27 = tpu.iota {dimensions = array<i32: 0>} : vector<16x256xi32>
    %28 = arith.sitofp %27 : vector<16x256xi32> to vector<16x256xf32>
    %29 = vector.broadcast %19 : vector<1x256xf32> to vector<16x256xf32>
    %30 = arith.subf %28, %29 : vector<16x256xf32>
    %31 = math.absf %30 : vector<16x256xf32>
    %cst = arith.constant 1.000000e+00 : f32
    %32 = vector.broadcast %cst : f32 to vector<16x256xf32>
    %33 = arith.subf %32, %31 : vector<16x256xf32>
    %cst_0 = arith.constant 0.000000e+00 : f32
    %34 = vector.broadcast %cst_0 : f32 to vector<16x256xf32>
    %35 = arith.maximumf %34, %33 : vector<16x256xf32>
    %36 = tpu.iota {dimensions = array<i32: 0>} : vector<16x256xi32>
    %37 = arith.sitofp %36 : vector<16x256xi32> to vector<16x256xf32>
    %38 = vector.broadcast %26 : vector<1x256xf32> to vector<16x256xf32>
    %39 = arith.subf %37, %38 : vector<16x256xf32>
    %40 = math.absf %39 : vector<16x256xf32>
    %cst_1 = arith.constant 1.000000e+00 : f32
    %41 = vector.broadcast %cst_1 : f32 to vector<16x256xf32>
    %42 = arith.subf %41, %40 : vector<16x256xf32>
    %cst_2 = arith.constant 0.000000e+00 : f32
    %43 = vector.broadcast %cst_2 : f32 to vector<16x256xf32>
    %44 = arith.maximumf %43, %42 : vector<16x256xf32>
    %c0_3 = arith.constant 0 : index
    %c0_4 = arith.constant 0 : index
    %c0_5 = arith.constant 0 : index
    %45 = vector.load %arg2[%c0_3, %c0_4, %c0_5] : memref<1x128x16xf32, #tpu.memory_space<vmem>>, vector<1x128x16xf32>
    %46 = vector.shape_cast %45 : vector<1x128x16xf32> to vector<128x16xf32>
    %cst_6 = arith.constant dense<0.000000e+00> : vector<128x256xf32>
    %47 = tpu.matmul %46, %35, %cst_6 {dimension_numbers = #tpu.dot_dimension_numbers<[1], [0], [0], [1], [0, 0, 1, 1], [], []>} : vector<128x16xf32>, vector<16x256xf32>, vector<128x256xf32> -> vector<128x256xf32>
    %48 = vector.shape_cast %47 : vector<128x256xf32> to vector<8x16x256xf32>
    %49 = vector.shape_cast %44 : vector<16x256xf32> to vector<1x16x256xf32>
    %50 = vector.broadcast %49 : vector<1x16x256xf32> to vector<8x16x256xf32>
    %51 = arith.mulf %48, %50 : vector<8x16x256xf32>
    %cst_7 = arith.constant dense<0.000000e+00> : vector<8x256xf32>
    %52 = vector.multi_reduction <add>, %51, %cst_7 [1] : vector<8x16x256xf32> to vector<8x256xf32>
    %c0_8 = arith.constant 0 : index
    %c0_9 = arith.constant 0 : index
    %c0_10 = arith.constant 0 : index
    %53 = vector.load %arg3[%c0_8, %c0_9, %c0_10] : memref<1x8x256xf32, #tpu.memory_space<vmem>>, vector<1x8x256xf32>
    %54 = vector.shape_cast %53 : vector<1x8x256xf32> to vector<8x256xf32>
    %55 = vector.shape_cast %52 : vector<8x256xf32> to vector<1x8x256xf32>
    tpu.vector_store %arg3[%c0_8, %c0_9, %c0_10], %55 {strides = array<i32>} : memref<1x8x256xf32, #tpu.memory_space<vmem>>, vector<1x8x256xf32>,
    return
  }
  func.func @transform_0(%arg0: i32) -> i32 {
    %c0_i32 = arith.constant 0 : i32
    %c0_i32_0 = arith.constant 0 : i32
    return %c0_i32 : i32
  }
  func.func @transform_1(%arg0: i32) -> (i32, i32, i32) {
    %c0_i32 = arith.constant 0 : i32
    %c0_i32_0 = arith.constant 0 : i32
    %c0_i32_1 = arith.constant 0 : i32
    return %arg0, %c0_i32, %c0_i32_0 : i32, i32, i32
  }
  func.func @transform_2(%arg0: i32) -> (i32, i32, i32) {
    %c0_i32 = arith.constant 0 : i32
    %c0_i32_0 = arith.constant 0 : i32
    %c0_i32_1 = arith.constant 0 : i32
    return %arg0, %c0_i32, %c0_i32_0 : i32, i32, i32
  }
}

</mosaic_0001>

<llo_original>
// kernel: tpu_custom_call.1
$region0: #{tpu_custom_call.1}
  #allocation0 [shape = 'u32[]', space=smem, size = 0x4, offset = 0x4, fixed_abs, tag = 'smem constant byte address 0x4 - core index']
  #allocation1 [shape = 'u32[144,128]{1,0:T(1,128)}', space=vmem, size = 0x12000, scoped, tag = 'internal scratch']
  %s0 = inlined_call_operand.vmem [shape: f32[6], index: 0, kind: input, shape index: {}]
  %s1 = inlined_call_operand.vmem [shape: f32[1,128,16], index: 1, kind: input, shape index: {}]
  %s2 = inlined_call_operand.hbm [shape: f32[1,8,256], index: 2, kind: output, shape index: {}]
  %s3 = sld [smem:[#allocation0]]
  $region22: #{tpu_custom_call.1} parent=0
    _
  %s5 = ssub.s32 1, %s3
  %s6 = scalar_select 0, %s5, %s3
  $region1: #{tpu_custom_call.1} parent=0
    #allocation2 [shape = 'u8[512]{0}', space=smem, size = 0x200, scoped, tag = 'input window, operand 0, single buffered']
    #allocation3 [shape = 's32[1]{0}', space=sflag, size = 0x4, scoped, tag = 'scoped memory for tpu_custom_call.1']
    #allocation4 [shape = 's32[1]{0}', space=sflag, size = 0x4, scoped, tag = 'scoped memory for tpu_custom_call.1']
    #allocation5 [shape = 'u8[8192]{0}', space=vmem, size = 0x2000, scoped, tag = 'output window, operand 0, single buffered']
    %7 = vsyncpa [#allocation4], 0
    %8 = vsyncpa [#allocation3], 0
    // Predicated region
    $region2: #{tpu_custom_call.1} parent=1 // pred_check
      _
    $region3: #{tpu_custom_call.1} parent=1 // pred_check_branch
      %10 = sbr.rel (0) target = $region5
    $region4: #{tpu_custom_call.1} parent=1 // pred_region
      %s12 = ssub.s32 16, 16
      %13 = vsyncadd [#allocation4], %s12
      %s15 = sshll.u32 %s0, 4
      %s16 = int_to_ptr.vmem [resolvable:$true] %s15
      %18 = dma.vmem_to_smem %s16, 16, [#allocation2], [#allocation4]
    $region5: #{tpu_custom_call.1} parent=1 // pred_fallthru
      _
    // Predicated region
    $region6: #{tpu_custom_call.1} parent=1 // pred_check
      _
    $region7: #{tpu_custom_call.1} parent=1 // pred_check_branch
      %20 = sbr.rel (0) target = $region9
    $region8: #{tpu_custom_call.1} parent=1 // pred_region
      _
    $region9: #{tpu_custom_call.1} parent=1 // pred_fallthru
      _
    // Predicated region
    $region10: #{tpu_custom_call.1} parent=1 // pred_check
      _
    $region11: #{tpu_custom_call.1} parent=1 // pred_check_branch
      %22 = sbr.rel (0) target = $region13
    $region12: #{tpu_custom_call.1} parent=1 // pred_region
      %23 = dma.done [#allocation4], 16
    $region13: #{tpu_custom_call.1} parent=1 // pred_fallthru
      _
    %24 = sfence
    %s25 = sld [smem:[#allocation2]]
    %s26 = sld [smem:[#allocation2 + $0x1]]
    %s27 = sld [smem:[#allocation2 + $0x2]]
    %s28 = sld [smem:[#allocation2 + $0x3]]
    %s29 = sld [smem:[#allocation2 + $0x4]]
    %s30 = sld [smem:[#allocation2 + $0x5]]
    %v31 = vlaneseq
    %v32 = vand.u32 %v31, 127
    %v33 = vadd.s32 %v32, 128
    %v34 = vshra.s32 %v32, 4
    %v35 = vshra.s32 %v33, 4
    %v36 = vand.u32 %v32, 15
    %v37 = vand.u32 %v33, 15
    %v38 = vcvt.s32.f32 %v34
    %v39 = vcvt.s32.f32 %v35
    %v40 = vcvt.s32.f32 %v36
    %v41 = vcvt.s32.f32 %v37
    %v42 = vstv %s25
    %v43 = vmul.f32 %v42, %v40
    %v44 = vmul.f32 %v42, %v41
    %v45 = vstv %s26
    %v46 = vmul.f32 %v45, %v38
    %v47 = vmul.f32 %v45, %v39
    %v48 = vadd.f32 %v43, %v46
    %v49 = vadd.f32 %v44, %v47
    %v50 = vstv %s27
    %v51 = vadd.f32 %v48, %v50
    %v52 = vadd.f32 %v49, %v50
    %v53 = vstv %s28
    %v54 = vmul.f32 %v53, %v40
    %v55 = vmul.f32 %v53, %v41
    %v56 = vstv %s29
    %v57 = vmul.f32 %v56, %v38
    %v58 = vmul.f32 %v56, %v39
    %v59 = vadd.f32 %v54, %v57
    %v60 = vadd.f32 %v55, %v58
    %v61 = vstv %s30
    %v62 = vadd.f32 %v59, %v61
    %v63 = vadd.f32 %v60, %v61
    %v64 = vlaneseq
    %v65 = vshrl.u32 %v64, 7
    %v66 = vadd.s32 %v65, 8
    %v67 = vcvt.s32.f32 %v65
    %v68 = vcvt.s32.f32 %v66
    %v69 = vsub.f32 %v67, %v51
    %v70 = vsub.f32 %v67, %v52
    %v71 = vsub.f32 %v68, %v51
    %v72 = vsub.f32 %v68, %v52
    %v73 = vand.u32 2147483647, %v69
    %v74 = vand.u32 2147483647, %v70
    %v75 = vand.u32 2147483647, %v71
    %v76 = vand.u32 2147483647, %v72
    %v77 = vsub.f32 1.0, %v73
    %v78 = vsub.f32 1.0, %v74
    %v79 = vsub.f32 1.0, %v75
    %v80 = vsub.f32 1.0, %v76
    %v81 = vmax.f32 %v77, 0.0
    %v82 = vmax.f32 %v78, 0.0
    %v83 = vmax.f32 %v79, 0.0
    %v84 = vmax.f32 %v80, 0.0
    %v85 = vsub.f32 %v67, %v62
    %v86 = vsub.f32 %v67, %v63
    %v87 = vsub.f32 %v68, %v62
    %v88 = vsub.f32 %v68, %v63
    %v89 = vand.u32 2147483647, %v85
    %v90 = vand.u32 2147483647, %v86
    %v91 = vand.u32 2147483647, %v87
    %v92 = vand.u32 2147483647, %v88
    %v93 = vsub.f32 1.0, %v89
    %v94 = vsub.f32 1.0, %v90
    %v95 = vsub.f32 1.0, %v91
    %v96 = vsub.f32 1.0, %v92
    %v97 = vmax.f32 %v93, 0.0
    %v98 = vmax.f32 %v94, 0.0
    %v99 = vmax.f32 %v95, 0.0
    %v100 = vmax.f32 %v96, 0.0
    %v101 = vld [vmem:[%s1] sm:$0xff]
    %v102 = vld [vmem:[%s1 + $0x8] sm:$0xff]
    %v103 = vld [vmem:[%s1 + $0x10] sm:$0xff]
    %v104 = vld [vmem:[%s1 + $0x18] sm:$0xff]
    %v105 = vld [vmem:[%s1 + $0x20] sm:$0xff]
    %v106 = vld [vmem:[%s1 + $0x28] sm:$0xff]
    %v107 = vld [vmem:[%s1 + $0x30] sm:$0xff]
    %v108 = vld [vmem:[%s1 + $0x38] sm:$0xff]
    %v109 = vld [vmem:[%s1 + $0x40] sm:$0xff]
    %v110 = vld [vmem:[%s1 + $0x48] sm:$0xff]
    %v111 = vld [vmem:[%s1 + $0x50] sm:$0xff]
    %v112 = vld [vmem:[%s1 + $0x58] sm:$0xff]
    %v113 = vld [vmem:[%s1 + $0x60] sm:$0xff]
    %v114 = vld [vmem:[%s1 + $0x68] sm:$0xff]
    %v115 = vld [vmem:[%s1 + $0x70] sm:$0xff]
    %v116 = vld [vmem:[%s1 + $0x78] sm:$0xff]
    %vm117 = vcmask 130048
    %v119 = vsel %vm117, %v101, 0
    %v122 = vsel %vm117, %v102, 0
    %v125 = vsel %vm117, %v103, 0
    %v128 = vsel %vm117, %v104, 0
    %v131 = vsel %vm117, %v105, 0
    %v134 = vsel %vm117, %v106, 0
    %v137 = vsel %vm117, %v107, 0
    %v140 = vsel %vm117, %v108, 0
    %v143 = vsel %vm117, %v109, 0
    %v146 = vsel %vm117, %v110, 0
    %v149 = vsel %vm117, %v111, 0
    %v152 = vsel %vm117, %v112, 0
    %v155 = vsel %vm117, %v113, 0
    %v158 = vsel %vm117, %v114, 0
    %v161 = vsel %vm117, %v115, 0
    %v164 = vsel %vm117, %v116, 0
    %166 = vmatprep.subr.mxu0 0.0
    %167 = vmatpush1.msra.mxu0 0.0
    %168 = vmatprep.subr.mxu0 0.0
    %169 = vmatpush1.msra.mxu0 0.0
    %170 = vmatprep.subr.mxu0 0.0
    %171 = vmatpush1.msra.mxu0 0.0
    %172 = vmatprep.subr.mxu0 0.0
    %173 = vmatpush1.msra.mxu0 0.0
    %174 = vmatprep.subr.mxu0 0.0
    %175 = vmatpush1.msra.mxu0 0.0
    %176 = vmatprep.subr.mxu0 0.0
    %177 = vmatpush1.msra.mxu0 0.0
    %178 = vmatprep.subr.mxu0 0.0
    %179 = vmatpush1.msra.mxu0 0.0
    %180 = vmatprep.subr.mxu0 0.0
    %181 = vmatpush1.msra.mxu0 0.0
    %182 = vmatprep.subr.mxu0 0.0
    %183 = vmatpush1.msra.mxu0 0.0
    %184 = vmatprep.subr.mxu0 0.0
    %185 = vmatpush1.msra.mxu0 0.0
    %186 = vmatprep.subr.mxu0 0.0
    %187 = vmatpush1.msra.mxu0 0.0
    %188 = vmatprep.subr.mxu0 0.0
    %189 = vmatpush1.msra.mxu0 0.0
    %190 = vmatprep.subr.mxu0 0.0
    %191 = vmatpush1.msra.mxu0 0.0
    %192 = vmatprep.subr.mxu0 0.0
    %193 = vmatpush1.msra.mxu0 0.0
    %194 = vmatprep.subr.mxu0 %v84
    %195 = vmatpush1.msra.mxu0 %v83
    %196 = vmatprep.subr.mxu0 %v82
    %197 = vmatpush1.msra.mxu0 %v81
    %198 = vmatprep.subr.mxu0 0.0
    %199 = vmatpush2.msra.mxu0 0.0
    %200 = vmatprep.subr.mxu0 0.0
    %201 = vmatpush2.msra.mxu0 0.0
    %202 = vmatprep.subr.mxu0 0.0
    %203 = vmatpush2.msra.mxu0 0.0
    %204 = vmatprep.subr.mxu0 0.0
    %205 = vmatpush2.msra.mxu0 0.0
    %206 = vmatprep.subr.mxu0 0.0
    %207 = vmatpush2.msra.mxu0 0.0
    %208 = vmatprep.subr.mxu0 0.0
    %209 = vmatpush2.msra.mxu0 0.0
    %210 = vmatprep.subr.mxu0 0.0
    %211 = vmatpush2.msra.mxu0 0.0
    %212 = vmatprep.subr.mxu0 0.0
    %213 = vmatpush2.msra.mxu0 0.0
    %214 = vmatprep.subr.mxu0 0.0
    %215 = vmatpush2.msra.mxu0 0.0
    %216 = vmatprep.subr.mxu0 0.0
    %217 = vmatpush2.msra.mxu0 0.0
    %218 = vmatprep.subr.mxu0 0.0
    %219 = vmatpush2.msra.mxu0 0.0
    %220 = vmatprep.subr.mxu0 0.0
    %221 = vmatpush2.msra.mxu0 0.0
    %222 = vmatprep.subr.mxu0 0.0
    %223 = vmatpush2.msra.mxu0 0.0
    %224 = vmatprep.subr.mxu0 0.0
    %225 = vmatpush2.msra.mxu0 0.0
    %226 = vmatprep.subr.mxu0 0.0
    %227 = vmatpush2.msra.mxu0 0.0
    %228 = vmatprep.subr.mxu0 0.0
    %229 = vmatpush2.msra.mxu0 0.0
    %230 = vmatprep.mubr.f32.mxu0 0.0
    %231 = vmatmul.mubr.f32.gmra.mxu0 %v119
    %v232 = vpop.f32.mrf.mxu0
    %v233 = vadd.f32 0.0, %v232
    %v234 = vpop.f32.mrf.mxu0
    %v235 = vadd.f32 0.0, %v234
    %236 = vmatprep.mubr.f32.mxu0 0.0
    %237 = vmatmul.mubr.f32.gmra.mxu0 %v122
    %v238 = vpop.f32.mrf.mxu0
    %v239 = vadd.f32 0.0, %v238
    %v240 = vpop.f32.mrf.mxu0
    %v241 = vadd.f32 0.0, %v240
    %242 = vmatprep.mubr.f32.mxu0 0.0
    %243 = vmatmul.mubr.f32.gmra.mxu0 %v125
    %v244 = vpop.f32.mrf.mxu0
    %v245 = vadd.f32 0.0, %v244
    %v246 = vpop.f32.mrf.mxu0
    %v247 = vadd.f32 0.0, %v246
    %248 = vmatprep.mubr.f32.mxu0 0.0
    %249 = vmatmul.mubr.f32.gmra.mxu0 %v128
    %v250 = vpop.f32.mrf.mxu0
    %v251 = vadd.f32 0.0, %v250
    %v252 = vpop.f32.mrf.mxu0
    %v253 = vadd.f32 0.0, %v252
    %254 = vmatprep.mubr.f32.mxu0 0.0
    %255 = vmatmul.mubr.f32.gmra.mxu0 %v131
    %v256 = vpop.f32.mrf.mxu0
    %v257 = vadd.f32 0.0, %v256
    %v258 = vpop.f32.mrf.mxu0
    %v259 = vadd.f32 0.0, %v258
    %260 = vmatprep.mubr.f32.mxu0 0.0
    %261 = vmatmul.mubr.f32.gmra.mxu0 %v134
    %v262 = vpop.f32.mrf.mxu0
    %v263 = vadd.f32 0.0, %v262
    %v264 = vpop.f32.mrf.mxu0
    %v265 = vadd.f32 0.0, %v264
    %266 = vmatprep.mubr.f32.mxu0 0.0
    %267 = vmatmul.mubr.f32.gmra.mxu0 %v137
    %v268 = vpop.f32.mrf.mxu0
    %v269 = vadd.f32 0.0, %v268
    %v270 = vpop.f32.mrf.mxu0
    %v271 = vadd.f32 0.0, %v270
    %272 = vmatprep.mubr.f32.mxu0 0.0
    %273 = vmatmul.mubr.f32.gmra.mxu0 %v140
    %v274 = vpop.f32.mrf.mxu0
    %v275 = vadd.f32 0.0, %v274
    %v276 = vpop.f32.mrf.mxu0
    %v277 = vadd.f32 0.0, %v276
    %278 = vmatprep.mubr.f32.mxu0 0.0
    %279 = vmatmul.mubr.f32.gmra.mxu0 %v143
    %v280 = vpop.f32.mrf.mxu0
    %v281 = vadd.f32 0.0, %v280
    %v282 = vpop.f32.mrf.mxu0
    %v283 = vadd.f32 0.0, %v282
    %284 = vmatprep.mubr.f32.mxu0 0.0
    %285 = vmatmul.mubr.f32.gmra.mxu0 %v146
    %v286 = vpop.f32.mrf.mxu0
    %v287 = vadd.f32 0.0, %v286
    %v288 = vpop.f32.mrf.mxu0
    %v289 = vadd.f32 0.0, %v288
    %290 = vmatprep.mubr.f32.mxu0 0.0
    %291 = vmatmul.mubr.f32.gmra.mxu0 %v149
    %v292 = vpop.f32.mrf.mxu0
    %v293 = vadd.f32 0.0, %v292
    %v294 = vpop.f32.mrf.mxu0
    %v295 = vadd.f32 0.0, %v294
    %296 = vmatprep.mubr.f32.mxu0 0.0
    %297 = vmatmul.mubr.f32.gmra.mxu0 %v152
    %v298 = vpop.f32.mrf.mxu0
    %v299 = vadd.f32 0.0, %v298
    %v300 = vpop.f32.mrf.mxu0
    %v301 = vadd.f32 0.0, %v300
    %302 = vmatprep.mubr.f32.mxu0 0.0
    %303 = vmatmul.mubr.f32.gmra.mxu0 %v155
    %v304 = vpop.f32.mrf.mxu0
    %v305 = vadd.f32 0.0, %v304
    %v306 = vpop.f32.mrf.mxu0
    %v307 = vadd.f32 0.0, %v306
    %308 = vmatprep.mubr.f32.mxu0 0.0
    %309 = vmatmul.mubr.f32.gmra.mxu0 %v158
    %v310 = vpop.f32.mrf.mxu0
    %v311 = vadd.f32 0.0, %v310
    %v312 = vpop.f32.mrf.mxu0
    %v313 = vadd.f32 0.0, %v312
    %314 = vmatprep.mubr.f32.mxu0 0.0
    %315 = vmatmul.mubr.f32.gmra.mxu0 %v161
    %v316 = vpop.f32.mrf.mxu0
    %v317 = vadd.f32 0.0, %v316
    %v318 = vpop.f32.mrf.mxu0
    %v319 = vadd.f32 0.0, %v318
    %320 = vmatprep.mubr.f32.mxu0 0.0
    %321 = vmatmul.mubr.f32.gmra.mxu0 %v164
    %v322 = vpop.f32.mrf.mxu0
    %v323 = vadd.f32 0.0, %v322
    %v324 = vpop.f32.mrf.mxu0
    %v325 = vadd.f32 0.0, %v324
    %326 = vdwg.mxu0
    %v327 = vmul.f32 %v233, %v97
    %v328 = vmul.f32 %v235, %v98
    %v329 = vmul.f32 %v239, %v99
    %v330 = vmul.f32 %v241, %v100
    %v331 = vmul.f32 %v245, %v97
    %v332 = vmul.f32 %v247, %v98
    %v333 = vmul.f32 %v251, %v99
    %v334 = vmul.f32 %v253, %v100
    %v335 = vmul.f32 %v257, %v97
    %v336 = vmul.f32 %v259, %v98
    %v337 = vmul.f32 %v263, %v99
    %v338 = vmul.f32 %v265, %v100
    %v339 = vmul.f32 %v269, %v97
    %v340 = vmul.f32 %v271, %v98
    %v341 = vmul.f32 %v275, %v99
    %v342 = vmul.f32 %v277, %v100
    %v343 = vmul.f32 %v281, %v97
    %v344 = vmul.f32 %v283, %v98
    %v345 = vmul.f32 %v287, %v99
    %v346 = vmul.f32 %v289, %v100
    %v347 = vmul.f32 %v293, %v97
    %v348 = vmul.f32 %v295, %v98
    %v349 = vmul.f32 %v299, %v99
    %v350 = vmul.f32 %v301, %v100
    %v351 = vmul.f32 %v305, %v97
    %v352 = vmul.f32 %v307, %v98
    %v353 = vmul.f32 %v311, %v99
    %v354 = vmul.f32 %v313, %v100
    %v355 = vmul.f32 %v317, %v97
    %v356 = vmul.f32 %v319, %v98
    %v357 = vmul.f32 %v323, %v99
    %v358 = vmul.f32 %v325, %v100
    %v359 = vadd.f32 %v327, %v329
    %v360 = vrot.slane %v359, 4
    %v361 = vadd.f32 %v359, %v360
    %v362 = vrot.slane %v361, 2
    %v363 = vadd.f32 %v361, %v362
    %v364 = vrot.slane %v363, 1
    %v365 = vadd.f32 %v363, %v364
    %v366 = vadd.f32 %v328, %v330
    %v367 = vrot.slane %v366, 4
    %v368 = vadd.f32 %v366, %v367
    %v369 = vrot.slane %v368, 2
    %v370 = vadd.f32 %v368, %v369
    %v371 = vrot.slane %v370, 1
    %v372 = vadd.f32 %v370, %v371
    %v373 = vadd.f32 %v331, %v333
    %v374 = vrot.slane %v373, 4
    %v375 = vadd.f32 %v373, %v374
    %v376 = vrot.slane %v375, 2
    %v377 = vadd.f32 %v375, %v376
    %v378 = vrot.slane %v377, 1
    %v379 = vadd.f32 %v377, %v378
    %v380 = vadd.f32 %v332, %v334
    %v381 = vrot.slane %v380, 4
    %v382 = vadd.f32 %v380, %v381
    %v383 = vrot.slane %v382, 2
    %v384 = vadd.f32 %v382, %v383
    %v385 = vrot.slane %v384, 1
    %v386 = vadd.f32 %v384, %v385
    %v387 = vadd.f32 %v335, %v337
    %v388 = vrot.slane %v387, 4
    %v389 = vadd.f32 %v387, %v388
    %v390 = vrot.slane %v389, 2
    %v391 = vadd.f32 %v389, %v390
    %v392 = vrot.slane %v391, 1
    %v393 = vadd.f32 %v391, %v392
    %v394 = vadd.f32 %v336, %v338
    %v395 = vrot.slane %v394, 4
    %v396 = vadd.f32 %v394, %v395
    %v397 = vrot.slane %v396, 2
    %v398 = vadd.f32 %v396, %v397
    %v399 = vrot.slane %v398, 1
    %v400 = vadd.f32 %v398, %v399
    %v401 = vadd.f32 %v339, %v341
    %v402 = vrot.slane %v401, 4
    %v403 = vadd.f32 %v401, %v402
    %v404 = vrot.slane %v403, 2
    %v405 = vadd.f32 %v403, %v404
    %v406 = vrot.slane %v405, 1
    %v407 = vadd.f32 %v405, %v406
    %v408 = vadd.f32 %v340, %v342
    %v409 = vrot.slane %v408, 4
    %v410 = vadd.f32 %v408, %v409
    %v411 = vrot.slane %v410, 2
    %v412 = vadd.f32 %v410, %v411
    %v413 = vrot.slane %v412, 1
    %v414 = vadd.f32 %v412, %v413
    %v415 = vadd.f32 %v343, %v345
    %v416 = vrot.slane %v415, 4
    %v417 = vadd.f32 %v415, %v416
    %v418 = vrot.slane %v417, 2
    %v419 = vadd.f32 %v417, %v418
    %v420 = vrot.slane %v419, 1
    %v421 = vadd.f32 %v419, %v420
    %v422 = vadd.f32 %v344, %v346
    %v423 = vrot.slane %v422, 4
    %v424 = vadd.f32 %v422, %v423
    %v425 = vrot.slane %v424, 2
    %v426 = vadd.f32 %v424, %v425
    %v427 = vrot.slane %v426, 1
    %v428 = vadd.f32 %v426, %v427
    %v429 = vadd.f32 %v347, %v349
    %v430 = vrot.slane %v429, 4
    %v431 = vadd.f32 %v429, %v430
    %v432 = vrot.slane %v431, 2
    %v433 = vadd.f32 %v431, %v432
    %v434 = vrot.slane %v433, 1
    %v435 = vadd.f32 %v433, %v434
    %v436 = vadd.f32 %v348, %v350
    %v437 = vrot.slane %v436, 4
    %v438 = vadd.f32 %v436, %v437
    %v439 = vrot.slane %v438, 2
    %v440 = vadd.f32 %v438, %v439
    %v441 = vrot.slane %v440, 1
    %v442 = vadd.f32 %v440, %v441
    %v443 = vadd.f32 %v351, %v353
    %v444 = vrot.slane %v443, 4
    %v445 = vadd.f32 %v443, %v444
    %v446 = vrot.slane %v445, 2
    %v447 = vadd.f32 %v445, %v446
    %v448 = vrot.slane %v447, 1
    %v449 = vadd.f32 %v447, %v448
    %v450 = vadd.f32 %v352, %v354
    %v451 = vrot.slane %v450, 4
    %v452 = vadd.f32 %v450, %v451
    %v453 = vrot.slane %v452, 2
    %v454 = vadd.f32 %v452, %v453
    %v455 = vrot.slane %v454, 1
    %v456 = vadd.f32 %v454, %v455
    %v457 = vadd.f32 %v355, %v357
    %v458 = vrot.slane %v457, 4
    %v459 = vadd.f32 %v457, %v458
    %v460 = vrot.slane %v459, 2
    %v461 = vadd.f32 %v459, %v460
    %v462 = vrot.slane %v461, 1
    %v463 = vadd.f32 %v461, %v462
    %v464 = vadd.f32 %v356, %v358
    %v465 = vrot.slane %v464, 4
    %v466 = vadd.f32 %v464, %v465
    %v467 = vrot.slane %v466, 2
    %v468 = vadd.f32 %v466, %v467
    %v469 = vrot.slane %v468, 1
    %v470 = vadd.f32 %v468, %v469
    %vm487 = vcmask 1041409
    %v488 = vsel %vm487, %v379, %v365
    %vm489 = vcmask 1042434
    %v490 = vsel %vm489, %v393, %v488
    %vm491 = vcmask 1043459
    %v492 = vsel %vm491, %v407, %v490
    %vm493 = vcmask 1044484
    %v494 = vsel %vm493, %v421, %v492
    %vm495 = vcmask 1045509
    %v496 = vsel %vm495, %v435, %v494
    %vm497 = vcmask 1046534
    %v498 = vsel %vm497, %v449, %v496
    %vm499 = vcmask 1047559
    %v500 = vsel %vm499, %v463, %v498
    %v501 = vsel %vm487, %v386, %v372
    %v502 = vsel %vm489, %v400, %v501
    %v503 = vsel %vm491, %v414, %v502
    %v504 = vsel %vm493, %v428, %v503
    %v505 = vsel %vm495, %v442, %v504
    %v506 = vsel %vm497, %v456, %v505
    %v507 = vsel %vm499, %v470, %v506
    %510 = vst [vmem:[#allocation5] sm:$0xff] %v500
    %511 = vst [vmem:[#allocation5 + $0x8] sm:$0xff] %v507
    // Predicated region
    $region14: #{tpu_custom_call.1} parent=1 // pred_check
      _
    $region15: #{tpu_custom_call.1} parent=1 // pred_check_branch
      %513 = sbr.rel (0) target = $region17
    $region16: #{tpu_custom_call.1} parent=1 // pred_region
      %s515 = ssub.s32 256, 256
      %516 = vsyncadd [#allocation3], %s515
      %s518 = sshll.u32 [#allocation5], 4
      %s519 = int_to_ptr.vmem [resolvable:$true] %s518
      %521 = dma.vmem_to_hbm [thread:$0]  %s519, 256, %s2, [#allocation3]
    $region17: #{tpu_custom_call.1} parent=1 // pred_fallthru
      _
    // Predicated region
    $region18: #{tpu_custom_call.1} parent=1 // pred_check
      _
    $region19: #{tpu_custom_call.1} parent=1 // pred_check_branch
      %523 = sbr.rel (0) target = $region21
    $region20: #{tpu_custom_call.1} parent=1 // pred_region
      %524 = dma.done [#allocation3], 256
    $region21: #{tpu_custom_call.1} parent=1 // pred_fallthru
      _
    %525 = vsyncpa [#allocation3], 1
    %526 = vsyncpa [#allocation4], 1

</llo_original>
